<compile_context>
chip_gen: v6e
topology: v6e:2x2x1
jax: 0.10.0
libtpu: 0.0.40
codegen_flags: <defaults>
</compile_context>

<pallas_src>
import numpy as np
import jax
import jax.numpy as jnp
from jax.experimental import pallas as pl
from jax.experimental.pallas import tpu as pltpu


# ----------------------------------------------------------------------------
# Parameter construction (host-side numpy, mirrors HiPPOScale.__init__)
# ----------------------------------------------------------------------------
def _transition(N):
    q = np.arange(N, dtype=np.float64)
    col, row = np.meshgrid(q, q)
    r = 2 * q + 1
    M = -(np.where(row >= col, r, 0) - np.diag(q))
    T = np.sqrt(np.diag(2 * q + 1))
    A = T @ M @ np.linalg.inv(T)
    B = np.diag(T)[:, None]
    return A, B.copy()


def build_hippo_scale_buffers(N, max_length=64):
    """Builds A_stacked (L,N,N), its pre-transpose A_stacked_T (L,N,N) and
    B_stacked (L,N)."""
    A, B = _transition(N)
    B = B.squeeze(-1)
    A_stacked = np.empty((max_length, N, N), dtype=np.float64)
    B_stacked = np.empty((max_length, N), dtype=np.float64)
    I = np.eye(N)
    for t in range(1, max_length + 1):
        At = A / t
        Bt = B / t
        # (I - At/2) is lower triangular; np.linalg.solve == solve_triangular here.
        A_stacked[t - 1] = np.linalg.solve(I - At / 2, I + At / 2)
        B_stacked[t - 1] = np.linalg.solve(I - At / 2, Bt)
    A_stacked_T = np.ascontiguousarray(A_stacked.transpose(0, 2, 1))
    return (jnp.asarray(A_stacked, jnp.float32),
            jnp.asarray(A_stacked_T, jnp.float32),
            jnp.asarray(B_stacked, jnp.float32))


# ----------------------------------------------------------------------------
# Single-step kernel: out = c @ A_T[t] + B[t] * f
#   (timestep t is a scalar-prefetch arg consumed only by the index_maps)
# ----------------------------------------------------------------------------
def hippo_scale_step_kernel(t_ref, c_ref, a_ref, b_ref, f_ref, o_ref):
    del t_ref                                    # only used in index_maps
    c = c_ref[...]                               # (batch, N)
    a_t = a_ref[0]                               # (N, N), already transposed
    b_t = b_ref[0]                               # (1, N)
    f = f_ref[...]                               # (batch, 1)
    lin = jnp.dot(c, a_t, preferred_element_type=jnp.float32)
    o_ref[...] = (lin + b_t * f).astype(o_ref.dtype)


def hippo_scale_forward(c, f, t, A_stacked_T, B_stacked):
    """One HiPPOScale step. c: (batch, N); f: (batch, 1); t: int time index."""
    batch, N = c.shape
    L = A_stacked_T.shape[0]
    B3 = B_stacked.reshape(L, 1, N)
    t_arr = jnp.atleast_1d(jnp.asarray(t, jnp.int32))     # (1,) in SMEM

    grid_spec = pltpu.PrefetchScalarGridSpec(
        num_scalar_prefetch=1,
        grid=(1,),
        in_specs=[
            pl.BlockSpec((batch, N), lambda i, t: (0, 0)),
            pl.BlockSpec((1, N, N), lambda i, t: (t[0], 0, 0)),   # A_T[t]
            pl.BlockSpec((1, 1, N), lambda i, t: (t[0], 0, 0)),   # B[t]
            pl.BlockSpec((batch, 1), lambda i, t: (0, 0)),
        ],
        out_specs=pl.BlockSpec((batch, N), lambda i, t: (0, 0)),
    )
    return pl.pallas_call(
        hippo_scale_step_kernel,
        out_shape=jax.ShapeDtypeStruct((batch, N), c.dtype),
        grid_spec=grid_spec,
        compiler_params=pltpu.CompilerParams(
            dimension_semantics=("arbitrary",)),
    )(t_arr, c, A_stacked_T, B3, f)


# ----------------------------------------------------------------------------
# Fused recurrence over a sequence (typical HiPPO usage):
#   c_s = c_{s-1} @ A_T[t_s] + B[t_s] * f_s,   one pallas_call for all steps,
#   state kept resident in VMEM scratch, per-step A/B gathered by the grid DMA.
# ----------------------------------------------------------------------------
def hippo_scale_scan_kernel(t_ref, c0_ref, f_ref, a_ref, b_ref, o_ref, c_acc):
    del t_ref
    @pl.when(pl.program_id(0) == 0)
    def _():
        c_acc[...] = c0_ref[...].astype(jnp.float32)

    c = c_acc[...]                               # (batch, N) resident state
    a_t = a_ref[0]                               # (N, N), transposed
    b_t = b_ref[0]                               # (1, N)
    f_t = f_ref[0]                               # (batch, 1)
    c_new = jnp.dot(c, a_t, preferred_element_type=jnp.float32) + b_t * f_t
    c_acc[...] = c_new
    o_ref[0] = c_new.astype(o_ref.dtype)


def hippo_scale_scan(c0, f_seq, t_seq, A_stacked_T, B_stacked):
    """Applies HiPPOScale over a sequence.
    c0: (batch, N); f_seq: (T, batch, 1); t_seq: (T,) int32 time indices.
    Returns all intermediate states, shape (T, batch, N)."""
    T, batch, _ = f_seq.shape
    L, N, _ = A_stacked_T.shape
    B3 = B_stacked.reshape(L, 1, N)
    t_seq = jnp.asarray(t_seq, jnp.int32)

    grid_spec = pltpu.PrefetchScalarGridSpec(
        num_scalar_prefetch=1,
        grid=(T,),
        in_specs=[
            pl.BlockSpec((batch, N), lambda s, t: (0, 0)),          # c0
            pl.BlockSpec((1, batch, 1), lambda s, t: (s, 0, 0)),    # f_s
            pl.BlockSpec((1, N, N), lambda s, t: (t[s], 0, 0)),     # A_T[t_s]
            pl.BlockSpec((1, 1, N), lambda s, t: (t[s], 0, 0)),     # B[t_s]
        ],
        out_specs=pl.BlockSpec((1, batch, N), lambda s, t: (s, 0, 0)),
        scratch_shapes=[pltpu.VMEM((batch, N), jnp.float32)],
    )
    return pl.pallas_call(
        hippo_scale_scan_kernel,
        out_shape=jax.ShapeDtypeStruct((T, batch, N), c0.dtype),
        grid_spec=grid_spec,
        compiler_params=pltpu.CompilerParams(
            dimension_semantics=("arbitrary",)),   # recurrence over time
    )(t_seq, c0, f_seq, A_stacked_T, B3)


# ----------------------------------------------------------------------------
# Plain-JAX references (use the un-transposed A, i.e. original F.linear form)
# ----------------------------------------------------------------------------
def hippo_scale_ref(c, f, t, A_stacked, B_stacked):
    A_t = A_stacked[t]          # (N, N)
    B_t = B_stacked[t]          # (N,)
    return c @ A_t.T + B_t * f  # f broadcasts (batch,1)*(N,) -> (batch,N)


if __name__ == "__main__":
    N = 128            # HiPPO state size (lane-dense: multiple of 128)
    max_length = 32    # maximum sequence length
    batch = 8
    T = 16             # scan length for the fused-recurrence variant

    A_stacked, A_stacked_T, B_stacked = build_hippo_scale_buffers(N, max_length)

    key = jax.random.PRNGKey(0)
    kc, kf, ks = jax.random.split(key, 3)
    c = jax.random.normal(kc, (batch, N), dtype=jnp.float32)
    f = jax.random.normal(kf, (batch, 1), dtype=jnp.float32)
    t = 5              # time index into [0, max_length)

    # --- single step (matches nn.Module.forward) -----------------------------
    out = hippo_scale_forward(c, f, t, A_stacked_T, B_stacked)
    out = jax.block_until_ready(out)
    ref = hippo_scale_ref(c, f, t, A_stacked, B_stacked)
    np.testing.assert_allclose(np.asarray(out), np.asarray(ref),
                               rtol=1e-4, atol=1e-4)

    # --- fused recurrence over a sequence ------------------------------------
    f_seq = jax.random.normal(ks, (T, batch, 1), dtype=jnp.float32)
    t_list = list(range(T))
    t_seq = jnp.asarray(t_list, jnp.int32)

    out_seq = hippo_scale_scan(c, f_seq, t_seq, A_stacked_T, B_stacked)
    out_seq = jax.block_until_ready(out_seq)

    c_ref = c
    refs = []
    for s in range(T):
        c_ref = hippo_scale_ref(c_ref, f_seq[s], t_list[s], A_stacked, B_stacked)
        refs.append(c_ref)
    ref_seq = jnp.stack(refs)
    np.testing.assert_allclose(np.asarray(out_seq), np.asarray(ref_seq),
                               rtol=1e-3, atol=1e-3)

    print("KERNEL_OK")
</pallas_src>

<mosaic_0001>
module attributes {stable_mosaic.version = 11 : i64} {
  func.func @hippo_scale_step_kernel(%arg0: i32, %arg1: memref<1xi32, #tpu.memory_space<smem>>, %arg2: memref<8x128xf32, #tpu.memory_space<vmem>>, %arg3: memref<1x128x128xf32, #tpu.memory_space<vmem>>, %arg4: memref<1x1x128xf32, #tpu.memory_space<vmem>>, %arg5: memref<8x1xf32, #tpu.memory_space<vmem>>, %arg6: memref<8x128xf32, #tpu.memory_space<vmem>>) attributes {dimension_semantics = [#tpu.dimension_semantics<arbitrary>], iteration_bounds = array<i64: 1>, scalar_prefetch = 1 : i64, scratch_operands = 0 : i64, tpu.core_type = #tpu.core_type<tc>, window_params = [{pipeline_mode = #tpu.pipeline_mode<synchronous>, transform_indices = @transform_0, window_bounds = array<i64: 8, 128>}, {transform_indices = @transform_1, window_bounds = array<i64: 1, 128, 128>}, {transform_indices = @transform_2, window_bounds = array<i64: 1, 1, 128>}, {pipeline_mode = #tpu.pipeline_mode<synchronous>, transform_indices = @transform_3, window_bounds = array<i64: 8, 1>}, {pipeline_mode = #tpu.pipeline_mode<synchronous>, transform_indices = @transform_4, window_bounds = array<i64: 8, 128>}]} {
    %c0 = arith.constant 0 : index
    %c0_0 = arith.constant 0 : index
    %0 = vector.load %arg2[%c0, %c0_0] : memref<8x128xf32, #tpu.memory_space<vmem>>, vector<8x128xf32>
    %c0_1 = arith.constant 0 : index
    %c0_2 = arith.constant 0 : index
    %c0_3 = arith.constant 0 : index
    %1 = vector.load %arg3[%c0_1, %c0_2, %c0_3] : memref<1x128x128xf32, #tpu.memory_space<vmem>>, vector<1x128x128xf32>
    %2 = vector.shape_cast %1 : vector<1x128x128xf32> to vector<128x128xf32>
    %c0_4 = arith.constant 0 : index
    %c0_5 = arith.constant 0 : index
    %c0_6 = arith.constant 0 : index
    %3 = vector.load %arg4[%c0_4, %c0_5, %c0_6] : memref<1x1x128xf32, #tpu.memory_space<vmem>>, vector<1x1x128xf32>
    %4 = vector.shape_cast %3 : vector<1x1x128xf32> to vector<1x128xf32>
    %c0_7 = arith.constant 0 : index
    %c0_8 = arith.constant 0 : index
    %5 = vector.load %arg5[%c0_7, %c0_8] : memref<8x1xf32, #tpu.memory_space<vmem>>, vector<8x1xf32>
    %cst = arith.constant dense<0.000000e+00> : vector<8x128xf32>
    %6 = tpu.matmul %0, %2, %cst {dimension_numbers = #tpu.dot_dimension_numbers<[1], [0], [0], [1], [0, 0, 1, 1], [], []>} : vector<8x128xf32>, vector<128x128xf32>, vector<8x128xf32> -> vector<8x128xf32>
    %7 = vector.broadcast %4 : vector<1x128xf32> to vector<8x128xf32>
    %8 = vector.broadcast %5 : vector<8x1xf32> to vector<8x128xf32>
    %9 = arith.mulf %7, %8 : vector<8x128xf32>
    %10 = arith.addf %6, %9 : vector<8x128xf32>
    %c0_9 = arith.constant 0 : index
    %c0_10 = arith.constant 0 : index
    %11 = vector.load %arg6[%c0_9, %c0_10] : memref<8x128xf32, #tpu.memory_space<vmem>>, vector<8x128xf32>
    tpu.vector_store %arg6[%c0_9, %c0_10], %10 {strides = array<i32>} : memref<8x128xf32, #tpu.memory_space<vmem>>, vector<8x128xf32>,
    return
  }
  func.func @transform_0(%arg0: i32, %arg1: memref<1xi32, #tpu.memory_space<smem>>) -> (i32, i32) {
    %c0_i32 = arith.constant 0 : i32
    %c0_i32_0 = arith.constant 0 : i32
    %c0_i32_1 = arith.constant 0 : i32
    return %c0_i32, %c0_i32_0 : i32, i32
  }
  func.func @transform_1(%arg0: i32, %arg1: memref<1xi32, #tpu.memory_space<smem>>) -> (i32, i32, i32) {
    %c0 = arith.constant 0 : index
    %0 = memref.load %arg1[%c0] : memref<1xi32, #tpu.memory_space<smem>>
    %c0_i32 = arith.constant 0 : i32
    %c0_i32_0 = arith.constant 0 : i32
    %c0_i32_1 = arith.constant 0 : i32
    return %0, %c0_i32, %c0_i32_0 : i32, i32, i32
  }
  func.func @transform_2(%arg0: i32, %arg1: memref<1xi32, #tpu.memory_space<smem>>) -> (i32, i32, i32) {
    %c0 = arith.constant 0 : index
    %0 = memref.load %arg1[%c0] : memref<1xi32, #tpu.memory_space<smem>>
    %c0_i32 = arith.constant 0 : i32
    %c0_i32_0 = arith.constant 0 : i32
    %c0_i32_1 = arith.constant 0 : i32
    return %0, %c0_i32, %c0_i32_0 : i32, i32, i32
  }
  func.func @transform_3(%arg0: i32, %arg1: memref<1xi32, #tpu.memory_space<smem>>) -> (i32, i32) {
    %c0_i32 = arith.constant 0 : i32
    %c0_i32_0 = arith.constant 0 : i32
    %c0_i32_1 = arith.constant 0 : i32
    return %c0_i32, %c0_i32_0 : i32, i32
  }
  func.func @transform_4(%arg0: i32, %arg1: memref<1xi32, #tpu.memory_space<smem>>) -> (i32, i32) {
    %c0_i32 = arith.constant 0 : i32
    %c0_i32_0 = arith.constant 0 : i32
    %c0_i32_1 = arith.constant 0 : i32
    return %c0_i32, %c0_i32_0 : i32, i32
  }
}

</mosaic_0001>

<llo_original>
// kernel: tpu_custom_call.1
$region0: #{tpu_custom_call.1}
  #allocation0 [shape = 'u32[]', space=smem, size = 0x4, offset = 0x4, fixed_abs, tag = 'smem constant byte address 0x4 - core index']
  #allocation1 [shape = 'u32[144,128]{1,0:T(1,128)}', space=vmem, size = 0x12000, scoped, tag = 'internal scratch']
  #allocation2 [shape = 's32[1]{0}', space=sflag, size = 0x4, scoped, tag = 'scoped memory for tpu_custom_call.1']
  #allocation3 [shape = 's32[1]{0:T(128)S(6)}', space=smem, size = 0x200, scoped, tag = 'prefetched SMEM operand 0']
  %s0 = inlined_call_operand.<no memory space> [shape: s32[1], index: 0, kind: input, shape index: {}]
  %s1 = inlined_call_operand.hbm [shape: f32[8,128], index: 1, kind: input, shape index: {}]
  %s2 = inlined_call_operand.hbm [shape: f32[32,128,128], index: 2, kind: input, shape index: {}]
  %s3 = inlined_call_operand.hbm [shape: f32[32,1,128], index: 3, kind: input, shape index: {}]
  %s4 = inlined_call_operand.vmem [shape: f32[8,1], index: 4, kind: input, shape index: {}]
  %s5 = inlined_call_operand.hbm [shape: f32[8,128], index: 5, kind: output, shape index: {}]
  %s6 = sld [smem:[#allocation0]]
  $region38: #{tpu_custom_call.1} parent=0
    _
  %s8 = ssub.s32 1, %s6
  %s9 = scalar_select 0, %s8, %s6
  %10 = sst [smem:[#allocation3]] %s0
  $region1: #{tpu_custom_call.1} parent=0
    #allocation4 [shape = 'u8[4096]{0}', space=vmem, size = 0x1000, scoped, tag = 'input window, operand 1, single buffered']
    #allocation5 [shape = 's32[1]{0}', space=sflag, size = 0x4, scoped, tag = 'scoped memory for tpu_custom_call.1']
    #allocation6 [shape = 's32[1]{0}', space=sflag, size = 0x4, scoped, tag = 'scoped memory for tpu_custom_call.1']
    #allocation7 [shape = 'u8[65536]{0}', space=vmem, size = 0x10000, scoped, tag = 'input window, operand 2, single buffered']
    #allocation8 [shape = 's32[1]{0}', space=sflag, size = 0x4, scoped, tag = 'scoped memory for tpu_custom_call.1']
    #allocation9 [shape = 'u8[512]{0}', space=vmem, size = 0x400, scoped, tag = 'input window, operand 3, single buffered']
    #allocation10 [shape = 'u8[4096]{0}', space=vmem, size = 0x1000, scoped, tag = 'output window, operand 0, single buffered']
    %11 = vsyncpa [#allocation5], 0
    %12 = vsyncpa [#allocation8], 0
    %13 = vsyncpa [#allocation6], 0
    // Predicated region
    $region2: #{tpu_custom_call.1} parent=1 // pred_check
      _
    $region3: #{tpu_custom_call.1} parent=1 // pred_check_branch
      %15 = sbr.rel (0) target = $region5
    $region4: #{tpu_custom_call.1} parent=1 // pred_region
      %s17 = ssub.s32 128, 128
      %18 = vsyncadd [#allocation5], %s17
      %s20 = sshll.u32 [#allocation4], 4
      %s21 = int_to_ptr.vmem [resolvable:$true] %s20
      %23 = dma.hbm_to_vmem [thread:$0]  %s1, 128, %s21, [#allocation5]
    $region5: #{tpu_custom_call.1} parent=1 // pred_fallthru
      _
    // Predicated region
    $region6: #{tpu_custom_call.1} parent=1 // pred_check
      _
    $region7: #{tpu_custom_call.1} parent=1 // pred_check_branch
      %25 = sbr.rel (0) target = $region9
    $region8: #{tpu_custom_call.1} parent=1 // pred_region
      %s26 = sld [smem:[#allocation3]]
      %s28 = ssub.s32 2048, 2048
      %29 = vsyncadd [#allocation8], %s28
      %s30 = smul.addr %s26, 16
      %s31 = smul.addr %s30, 128
      %s32 = scalar_lea.hbm %s2, %s31
      %s33 = sshll.u32 [#allocation7], 4
      %s34 = int_to_ptr.vmem [resolvable:$true] %s33
      %39 = dma.hbm_to_vmem [thread:$0]  %s32, 2048, %s34, [#allocation8], 128, 128, 8
    $region9: #{tpu_custom_call.1} parent=1 // pred_fallthru
      _
    // Predicated region
    $region10: #{tpu_custom_call.1} parent=1 // pred_check
      _
    $region11: #{tpu_custom_call.1} parent=1 // pred_check_branch
      %41 = sbr.rel (0) target = $region13
    $region12: #{tpu_custom_call.1} parent=1 // pred_region
      %s42 = sld [smem:[#allocation3]]
      %s44 = ssub.s32 16, 16
      %45 = vsyncadd [#allocation8], %s44
      %s46 = smul.addr %s42, 16
      %s47 = scalar_lea.hbm %s3, %s46
      %s49 = sshll.u32 [#allocation9], 4
      %s50 = int_to_ptr.vmem [resolvable:$true] %s49
      %52 = dma.hbm_to_vmem [thread:$0]  %s47, 16, %s50, [#allocation8]
    $region13: #{tpu_custom_call.1} parent=1 // pred_fallthru
      _
    // Predicated region
    $region14: #{tpu_custom_call.1} parent=1 // pred_check
      _
    $region15: #{tpu_custom_call.1} parent=1 // pred_check_branch
      %54 = sbr.rel (0) target = $region17
    $region16: #{tpu_custom_call.1} parent=1 // pred_region
      _
    $region17: #{tpu_custom_call.1} parent=1 // pred_fallthru
      _
    // Predicated region
    $region18: #{tpu_custom_call.1} parent=1 // pred_check
      _
    $region19: #{tpu_custom_call.1} parent=1 // pred_check_branch
      %56 = sbr.rel (0) target = $region21
    $region20: #{tpu_custom_call.1} parent=1 // pred_region
      %57 = dma.done [#allocation5], 128
    $region21: #{tpu_custom_call.1} parent=1 // pred_fallthru
      _
    // Predicated region
    $region22: #{tpu_custom_call.1} parent=1 // pred_check
      _
    $region23: #{tpu_custom_call.1} parent=1 // pred_check_branch
      %59 = sbr.rel (0) target = $region25
    $region24: #{tpu_custom_call.1} parent=1 // pred_region
      %60 = dma.done [#allocation8], 2048
    $region25: #{tpu_custom_call.1} parent=1 // pred_fallthru
      _
    // Predicated region
    $region26: #{tpu_custom_call.1} parent=1 // pred_check
      _
    $region27: #{tpu_custom_call.1} parent=1 // pred_check_branch
      %62 = sbr.rel (0) target = $region29
    $region28: #{tpu_custom_call.1} parent=1 // pred_region
      %63 = dma.done [#allocation8], 16
    $region29: #{tpu_custom_call.1} parent=1 // pred_fallthru
      _
    %s64 = sld [smem:[#allocation3]]
    %s65 = sld [smem:[#allocation3]]
    %v66 = vld [vmem:[#allocation4] sm:$0xff]
    %v67 = vld [vmem:[#allocation7] sm:$0xff]
    %v68 = vld [vmem:[#allocation7 + $0x8] sm:$0xff]
    %v69 = vld [vmem:[#allocation7 + $0x10] sm:$0xff]
    %v70 = vld [vmem:[#allocation7 + $0x18] sm:$0xff]
    %v71 = vld [vmem:[#allocation7 + $0x20] sm:$0xff]
    %v72 = vld [vmem:[#allocation7 + $0x28] sm:$0xff]
    %v73 = vld [vmem:[#allocation7 + $0x30] sm:$0xff]
    %v74 = vld [vmem:[#allocation7 + $0x38] sm:$0xff]
    %v75 = vld [vmem:[#allocation7 + $0x40] sm:$0xff]
    %v76 = vld [vmem:[#allocation7 + $0x48] sm:$0xff]
    %v77 = vld [vmem:[#allocation7 + $0x50] sm:$0xff]
    %v78 = vld [vmem:[#allocation7 + $0x58] sm:$0xff]
    %v79 = vld [vmem:[#allocation7 + $0x60] sm:$0xff]
    %v80 = vld [vmem:[#allocation7 + $0x68] sm:$0xff]
    %v81 = vld [vmem:[#allocation7 + $0x70] sm:$0xff]
    %v82 = vld [vmem:[#allocation7 + $0x78] sm:$0xff]
    %v83 = vld [vmem:[#allocation9] sm:$0x1]
    %v84 = vld [vmem:[%s4] sm:$0xff]
    %v86 = vlaneseq
    %v87 = vshrl.u32 %v86, 7
    %v88 = vsub.s32 0, %v87
    %v89 = vrot.slane %v83, %v88
    %92 = vset.pattern.permute.xlu0 0
    %93 = vperm.xlu0 %92, %v84
    %v94 = vpop.permute.xlu0 %93
    %v96 = vmul.f32 %v89, %v94
    %97 = vmatprep.subr.mxu0 0.0
    %98 = vmatpush1.msra.mxu0 %v82
    %99 = vmatprep.subr.mxu0 0.0
    %100 = vmatpush1.msra.mxu0 %v81
    %101 = vmatprep.subr.mxu0 0.0
    %102 = vmatpush1.msra.mxu0 %v80
    %103 = vmatprep.subr.mxu0 0.0
    %104 = vmatpush1.msra.mxu0 %v79
    %105 = vmatprep.subr.mxu0 0.0
    %106 = vmatpush1.msra.mxu0 %v78
    %107 = vmatprep.subr.mxu0 0.0
    %108 = vmatpush1.msra.mxu0 %v77
    %109 = vmatprep.subr.mxu0 0.0
    %110 = vmatpush1.msra.mxu0 %v76
    %111 = vmatprep.subr.mxu0 0.0
    %112 = vmatpush1.msra.mxu0 %v75
    %113 = vmatprep.subr.mxu0 0.0
    %114 = vmatpush1.msra.mxu0 %v74
    %115 = vmatprep.subr.mxu0 0.0
    %116 = vmatpush1.msra.mxu0 %v73
    %117 = vmatprep.subr.mxu0 0.0
    %118 = vmatpush1.msra.mxu0 %v72
    %119 = vmatprep.subr.mxu0 0.0
    %120 = vmatpush1.msra.mxu0 %v71
    %121 = vmatprep.subr.mxu0 0.0
    %122 = vmatpush1.msra.mxu0 %v70
    %123 = vmatprep.subr.mxu0 0.0
    %124 = vmatpush1.msra.mxu0 %v69
    %125 = vmatprep.subr.mxu0 0.0
    %126 = vmatpush1.msra.mxu0 %v68
    %127 = vmatprep.subr.mxu0 0.0
    %128 = vmatpush1.msra.mxu0 %v67
    %129 = vmatprep.subr.mxu0 0.0
    %130 = vmatpush2.msra.mxu0 0.0
    %131 = vmatprep.subr.mxu0 0.0
    %132 = vmatpush2.msra.mxu0 0.0
    %133 = vmatprep.subr.mxu0 0.0
    %134 = vmatpush2.msra.mxu0 0.0
    %135 = vmatprep.subr.mxu0 0.0
    %136 = vmatpush2.msra.mxu0 0.0
    %137 = vmatprep.subr.mxu0 0.0
    %138 = vmatpush2.msra.mxu0 0.0
    %139 = vmatprep.subr.mxu0 0.0
    %140 = vmatpush2.msra.mxu0 0.0
    %141 = vmatprep.subr.mxu0 0.0
    %142 = vmatpush2.msra.mxu0 0.0
    %143 = vmatprep.subr.mxu0 0.0
    %144 = vmatpush2.msra.mxu0 0.0
    %145 = vmatprep.subr.mxu0 0.0
    %146 = vmatpush2.msra.mxu0 0.0
    %147 = vmatprep.subr.mxu0 0.0
    %148 = vmatpush2.msra.mxu0 0.0
    %149 = vmatprep.subr.mxu0 0.0
    %150 = vmatpush2.msra.mxu0 0.0
    %151 = vmatprep.subr.mxu0 0.0
    %152 = vmatpush2.msra.mxu0 0.0
    %153 = vmatprep.subr.mxu0 0.0
    %154 = vmatpush2.msra.mxu0 0.0
    %155 = vmatprep.subr.mxu0 0.0
    %156 = vmatpush2.msra.mxu0 0.0
    %157 = vmatprep.subr.mxu0 0.0
    %158 = vmatpush2.msra.mxu0 0.0
    %159 = vmatprep.subr.mxu0 0.0
    %160 = vmatpush2.msra.mxu0 0.0
    %161 = vmatprep.mubr.f32.mxu0 0.0
    %162 = vmatmul.mubr.f32.gmra.mxu0 %v66
    %v163 = vpop.f32.mrf.mxu0
    %v164 = vadd.f32 %v96, %v163
    %v165 = vpop.f32.mrf.mxu0
    %166 = vdwg.mxu0
    %167 = vst [vmem:[#allocation10] sm:$0xff] %v164
    // Predicated region
    $region30: #{tpu_custom_call.1} parent=1 // pred_check
      _
    $region31: #{tpu_custom_call.1} parent=1 // pred_check_branch
      %169 = sbr.rel (0) target = $region33
    $region32: #{tpu_custom_call.1} parent=1 // pred_region
      %s171 = ssub.s32 128, 128
      %172 = vsyncadd [#allocation6], %s171
      %s174 = sshll.u32 [#allocation10], 4
      %s175 = int_to_ptr.vmem [resolvable:$true] %s174
      %177 = dma.vmem_to_hbm [thread:$0]  %s175, 128, %s5, [#allocation6]
    $region33: #{tpu_custom_call.1} parent=1 // pred_fallthru
      _
    // Predicated region
    $region34: #{tpu_custom_call.1} parent=1 // pred_check
      _
    $region35: #{tpu_custom_call.1} parent=1 // pred_check_branch
      %179 = sbr.rel (0) target = $region37
    $region36: #{tpu_custom_call.1} parent=1 // pred_region
      %180 = dma.done [#allocation6], 128
    $region37: #{tpu_custom_call.1} parent=1 // pred_fallthru
      _
    %181 = vsyncpa [#allocation5], 1
    %182 = vsyncpa [#allocation8], 1
    %183 = vsyncpa [#allocation6], 1

</llo_original>
